<compile_context>
chip_gen: v5e
topology: v5e:2x2
jax: 0.10.0
libtpu: 0.0.40
codegen_flags: <defaults>
</compile_context>

<pallas_src>
import functools

import jax
import jax.numpy as jnp
from jax.experimental import pallas as pl
from jax.experimental.pallas import tpu as pltpu


def _round_up(x, m):
    return ((x + m - 1) // m) * m


def _vmem_capacity_bytes():
    """Physical VMEM size of the current chip (conservative fallback: 64 MiB)."""
    try:
        return int(pltpu.get_tpu_info().vmem_capacity_bytes)
    except Exception:  # unknown chip / interpret mode
        return 64 << 20


def _pick_block_n(K, h0, w_itemsize, requested):
    """Pick the h0 tile width: VMEM-generation aware, clamped to budget."""
    vmem = _vmem_capacity_bytes()
    if requested is None:
        # v5e/v6e: 128 MiB VMEM -> 1024-wide w1 tiles; v7x: 64 MiB -> 512.
        requested = 1024 if vmem >= (100 << 20) else 512
    # Keep the double-buffered w1 tile (the dominant allocation) under ~40% of
    # physical VMEM so x, w2 and the output pipeline still fit comfortably.
    budget = int(vmem * 0.4)
    cap = max(128, (budget // (2 * K * w_itemsize)) // 128 * 128)
    tn = min(requested, cap)
    return h0 if h0 <= tn else tn


def _bottleneck_kernel(x_ref, w1_ref, b1_ref, w2_ref, o_ref):
    """One h0 tile: layer-1 matmul + bias + sigmoid, then layer-2 partial.

    Per grid step n:
      x_ref : (B, K)     bf16, constant block index -> resident in VMEM
      w1_ref: (K, tn)    streamed (dominant HBM traffic)
      b1_ref: (1, tn)
      w2_ref: (tn, h1)   streamed
      o_ref : (1, B, h1) f32 partial contribution of this h0 tile
    """
    h = jax.nn.sigmoid(
        jnp.dot(x_ref[...], w1_ref[...], preferred_element_type=jnp.float32)
        + b1_ref[...].astype(jnp.float32))
    # Dropout (eval mode) == identity.
    # TODO(synk): training-mode dropout (pltpu.prng_random_bits mask) not wired in.
    o_ref[0] = jnp.dot(h.astype(w2_ref.dtype), w2_ref[...],
                       preferred_element_type=jnp.float32)


@functools.partial(jax.jit, static_argnames=("block_n",))
def bottleneck_forward(x, w1, b1, w2, b2, *, block_n=None):
    """x: (B, in_dim); w1: (in_dim, h0); b1: (1, h0); w2: (h0, h1); b2: (1, h1).

    Weights stored pre-transposed (in_features, out_features), ideally bf16.
    `block_n` is the (maximum) h0 tile width; None -> auto-pick per chip.
    """
    B, in_dim = x.shape
    h0 = w1.shape[1]
    h1 = w2.shape[1]

    K = in_dim  # K axis collapsed: x stays resident, no layer-1 scratch needed.
    tn = _pick_block_n(K, h0, w1.dtype.itemsize, block_n)
    N = _round_up(h0, tn)

    # Zero padding of h0 is exact (see file header).  Keep padding values zero.
    if N != h0:
        w1 = jnp.pad(w1, ((0, 0), (0, N - h0)))
        b1 = jnp.pad(b1, ((0, 0), (0, N - h0)))
        w2 = jnp.pad(w2, ((0, N - h0), (0, 0)))

    n_tiles = N // tn

    # Double-buffered VMEM footprint estimate; raise the scoped limit to match
    # (capped at ~75% of physical VMEM so it never exceeds the chip).
    footprint = (2 * K * tn * w1.dtype.itemsize        # w1 tiles
                 + 2 * tn * h1 * w2.dtype.itemsize     # w2 tiles
                 + 2 * B * K * x.dtype.itemsize        # x (resident)
                 + 2 * tn * b1.dtype.itemsize          # b1
                 + 2 * B * h1 * 4                      # partial output tiles
                 + B * tn * 4)                         # sigmoid intermediate
    vmem_limit = min(int(footprint * 1.5) + (8 << 20),
                     (_vmem_capacity_bytes() * 3) // 4)

    bytes_accessed = (B * K * x.dtype.itemsize          # x fetched once
                      + K * N * w1.dtype.itemsize
                      + N * b1.dtype.itemsize
                      + N * h1 * w2.dtype.itemsize
                      + n_tiles * B * h1 * 4)           # partial outputs

    partials = pl.pallas_call(
        _bottleneck_kernel,
        out_shape=jax.ShapeDtypeStruct((n_tiles, B, h1), jnp.float32),
        grid_spec=pltpu.PrefetchScalarGridSpec(
            num_scalar_prefetch=0,
            grid=(n_tiles,),
            in_specs=[
                pl.BlockSpec((B, K), lambda n: (0, 0)),     # x (resident)
                pl.BlockSpec((K, tn), lambda n: (0, n)),    # w1 (streamed)
                pl.BlockSpec((1, tn), lambda n: (0, n)),    # b1
                pl.BlockSpec((tn, h1), lambda n: (n, 0)),   # w2 (streamed)
            ],
            out_specs=pl.BlockSpec((1, B, h1), lambda n: (n, 0, 0)),
        ),
        compiler_params=pltpu.CompilerParams(
            # Each grid step writes its own partial-output slice, so the h0
            # axis is truly parallel -> both v7x TensorCores stream half of w1.
            dimension_semantics=("parallel",),
            vmem_limit_bytes=vmem_limit,
        ),
        cost_estimate=pl.CostEstimate(
            flops=2 * B * (K * N + N * h1),
            transcendentals=B * N,
            bytes_accessed=bytes_accessed,
        ),
    )(x, w1, b1, w2)

    # Tiny epilogue (n_tiles * B * h1 f32): sum per-tile layer-2 partials,
    # add the layer-2 bias, apply the final sigmoid.
    out = jax.nn.sigmoid(jnp.sum(partials, axis=0) + b2)
    # Dropout (eval mode) == identity.
    return out


def init_bottleneck_params(key, in_dim, hidden_sizes, weight_dtype=jnp.bfloat16):
    """PyTorch-Linear-style init: U(-1/sqrt(fan_in), 1/sqrt(fan_in)).

    Weights returned already transposed to (in_features, out_features), cast to
    `weight_dtype` (bf16 by default to halve HBM traffic); biases stay f32.
    """
    params = []
    dims = [in_dim] + list(hidden_sizes)
    for i in range(len(hidden_sizes)):
        fan_in, fan_out = dims[i], dims[i + 1]
        key, kw, kb = jax.random.split(key, 3)
        bound = 1.0 / float(fan_in) ** 0.5
        w = jax.random.uniform(kw, (fan_in, fan_out), dtype=jnp.float32,
                               minval=-bound, maxval=bound).astype(weight_dtype)
        b = jax.random.uniform(kb, (1, fan_out), dtype=jnp.float32,
                               minval=-bound, maxval=bound)
        params.append((w, b))
    return params


def reference_forward(x, params):
    """Pure-JAX reference mirroring the kernel's numerics (bf16 MXU, f32 acc)."""
    h = x
    for w, b in params:
        z = jnp.dot(h.astype(w.dtype), w,
                    preferred_element_type=jnp.float32) + b
        h = jax.nn.sigmoid(z)
    return h


if __name__ == "__main__":
    # Small shapes consistent with the module (scaled-down stand-ins for the
    # real config in_dim ~6k, hidden_sizes=[3072, 256]).
    batch = 8
    in_dim = 512
    hidden_sizes = [512, 256]

    key = jax.random.PRNGKey(0)
    key, kx = jax.random.split(key)
    x = jax.random.normal(kx, (batch, in_dim),
                          dtype=jnp.float32).astype(jnp.bfloat16)

    (w1, b1), (w2, b2) = init_bottleneck_params(key, in_dim, hidden_sizes)

    # Small tile width here so the 1-D grid has >1 step and the partial-sum
    # path is exercised; real configs use the auto-picked (VMEM-aware) default.
    out = bottleneck_forward(x, w1, b1, w2, b2, block_n=256)
    out = jax.block_until_ready(out)

    ref = reference_forward(x, [(w1, b1), (w2, b2)])
    assert out.shape == (batch, hidden_sizes[-1]), out.shape
    max_err = float(jnp.max(jnp.abs(out - ref)))
    assert jnp.allclose(out, ref, atol=2e-4, rtol=1e-3), max_err

    print("KERNEL_OK")
</pallas_src>

<mosaic_0001>
module attributes {stable_mosaic.version = 11 : i64} {
  func.func @_bottleneck_kernel(%arg0: i32, %arg1: memref<8x512xbf16, #tpu.memory_space<vmem>>, %arg2: memref<512x256xbf16, #tpu.memory_space<vmem>>, %arg3: memref<1x256xf32, #tpu.memory_space<vmem>>, %arg4: memref<256x256xbf16, #tpu.memory_space<vmem>>, %arg5: memref<1x8x256xf32, #tpu.memory_space<vmem>>) attributes {dimension_semantics = [#tpu.dimension_semantics<parallel>], iteration_bounds = array<i64: 2>, scalar_prefetch = 0 : i64, scratch_operands = 0 : i64, tpu.core_type = #tpu.core_type<tc>, window_params = [{pipeline_mode = #tpu.pipeline_mode<synchronous>, transform_indices = @transform_0, window_bounds = array<i64: 8, 512>}, {transform_indices = @transform_1, window_bounds = array<i64: 512, 256>}, {transform_indices = @transform_2, window_bounds = array<i64: 1, 256>}, {transform_indices = @transform_3, window_bounds = array<i64: 256, 256>}, {transform_indices = @transform_4, window_bounds = array<i64: 1, 8, 256>}]} {
    %c0 = arith.constant 0 : index
    %c0_0 = arith.constant 0 : index
    %0 = vector.load %arg1[%c0, %c0_0] : memref<8x512xbf16, #tpu.memory_space<vmem>>, vector<8x512xbf16>
    %c0_1 = arith.constant 0 : index
    %c0_2 = arith.constant 0 : index
    %1 = vector.load %arg2[%c0_1, %c0_2] : memref<512x256xbf16, #tpu.memory_space<vmem>>, vector<512x256xbf16>
    %cst = arith.constant dense<0.000000e+00> : vector<8x256xf32>
    %2 = tpu.matmul %0, %1, %cst {dimension_numbers = #tpu.dot_dimension_numbers<[1], [0], [0], [1], [0, 0, 1, 1], [], []>} : vector<8x512xbf16>, vector<512x256xbf16>, vector<8x256xf32> -> vector<8x256xf32>
    %c0_3 = arith.constant 0 : index
    %c0_4 = arith.constant 0 : index
    %3 = vector.load %arg3[%c0_3, %c0_4] : memref<1x256xf32, #tpu.memory_space<vmem>>, vector<1x256xf32>
    %4 = vector.broadcast %3 : vector<1x256xf32> to vector<8x256xf32>
    %5 = arith.addf %2, %4 : vector<8x256xf32>
    %6 = arith.negf %5 : vector<8x256xf32>
    %7 = math.exp %6 : vector<8x256xf32>
    %cst_5 = arith.constant 1.000000e+00 : f32
    %8 = vector.broadcast %cst_5 : f32 to vector<8x256xf32>
    %9 = arith.addf %8, %7 : vector<8x256xf32>
    %10 = arith.divf %8, %9 : vector<8x256xf32>
    %11 = arith.truncf %10 : vector<8x256xf32> to vector<8x256xbf16>
    %c0_6 = arith.constant 0 : index
    %c0_7 = arith.constant 0 : index
    %12 = vector.load %arg4[%c0_6, %c0_7] : memref<256x256xbf16, #tpu.memory_space<vmem>>, vector<256x256xbf16>
    %cst_8 = arith.constant dense<0.000000e+00> : vector<8x256xf32>
    %13 = tpu.matmul %11, %12, %cst_8 {dimension_numbers = #tpu.dot_dimension_numbers<[1], [0], [0], [1], [0, 0, 1, 1], [], []>} : vector<8x256xbf16>, vector<256x256xbf16>, vector<8x256xf32> -> vector<8x256xf32>
    %c0_9 = arith.constant 0 : index
    %c0_10 = arith.constant 0 : index
    %c0_11 = arith.constant 0 : index
    %14 = vector.load %arg5[%c0_9, %c0_10, %c0_11] : memref<1x8x256xf32, #tpu.memory_space<vmem>>, vector<1x8x256xf32>
    %15 = vector.shape_cast %14 : vector<1x8x256xf32> to vector<8x256xf32>
    %16 = vector.shape_cast %13 : vector<8x256xf32> to vector<1x8x256xf32>
    tpu.vector_store %arg5[%c0_9, %c0_10, %c0_11], %16 {strides = array<i32>} : memref<1x8x256xf32, #tpu.memory_space<vmem>>, vector<1x8x256xf32>,
    return
  }
  func.func @transform_0(%arg0: i32) -> (i32, i32) {
    %c0_i32 = arith.constant 0 : i32
    %c0_i32_0 = arith.constant 0 : i32
    %c0_i32_1 = arith.constant 0 : i32
    return %c0_i32, %c0_i32_0 : i32, i32
  }
  func.func @transform_1(%arg0: i32) -> (i32, i32) {
    %c0_i32 = arith.constant 0 : i32
    %c0_i32_0 = arith.constant 0 : i32
    return %c0_i32, %arg0 : i32, i32
  }
  func.func @transform_2(%arg0: i32) -> (i32, i32) {
    %c0_i32 = arith.constant 0 : i32
    %c0_i32_0 = arith.constant 0 : i32
    return %c0_i32, %arg0 : i32, i32
  }
  func.func @transform_3(%arg0: i32) -> (i32, i32) {
    %c0_i32 = arith.constant 0 : i32
    %c0_i32_0 = arith.constant 0 : i32
    return %arg0, %c0_i32 : i32, i32
  }
  func.func @transform_4(%arg0: i32) -> (i32, i32, i32) {
    %c0_i32 = arith.constant 0 : i32
    %c0_i32_0 = arith.constant 0 : i32
    %c0_i32_1 = arith.constant 0 : i32
    return %arg0, %c0_i32, %c0_i32_0 : i32, i32, i32
  }
}

</mosaic_0001>

<llo_original>
// kernel: bottleneck_forward.1
$region0: #{bottleneck_forward.1}
  #allocation0 [shape = 'u32[]', space=smem, size = 0x4, offset = 0x4, fixed_abs, tag = 'smem constant byte address 0x4 - core index']
  #allocation1 [shape = 'u32[72,128]{1,0:T(1,128)}', space=vmem, size = 0x9000, scoped, tag = 'internal scratch']
  %s0 = inlined_call_operand.hbm [shape: bf16[8,512], index: 0, kind: input, shape index: {}]
  %s1 = inlined_call_operand.hbm [shape: bf16[512,512], index: 1, kind: input, shape index: {}]
  %s2 = inlined_call_operand.hbm [shape: f32[1,512], index: 2, kind: input, shape index: {}]
  %s3 = inlined_call_operand.hbm [shape: bf16[512,256], index: 3, kind: input, shape index: {}]
  %s4 = inlined_call_operand.vmem [shape: f32[2,8,256], index: 4, kind: output, shape index: {}]
  %s5 = sld [smem:[#allocation0]]
  $region65: #{bottleneck_forward.1} parent=0
    _
  %s7 = ssub.s32 1, %s5
  %s8 = scalar_select 0, %s7, %s5
  $region1: #{bottleneck_forward.1} parent=0
    #allocation2 [shape = 'u8[8192]{0}', space=vmem, size = 0x2000, scoped, tag = 'input window, operand 0, single buffered']
    #allocation3 [shape = 's32[2]{0}', space=sflag, size = 0x8, scoped, tag = 'scoped memory for bottleneck_forward.1']
    #allocation4 [shape = 'u8[524288]{0}', space=vmem, size = 0x80000, scoped, tag = 'input window, operand 1']
    #allocation5 [shape = 's32[2]{0}', space=sflag, size = 0x8, scoped, tag = 'scoped memory for bottleneck_forward.1']
    #allocation6 [shape = 'u8[2048]{0}', space=vmem, size = 0x800, scoped, tag = 'input window, operand 2']
    #allocation7 [shape = 'u8[262144]{0}', space=vmem, size = 0x40000, scoped, tag = 'input window, operand 3']
    #allocation8 [shape = 's32[2]{0}', space=sflag, size = 0x8, scoped, tag = 'scoped memory for bottleneck_forward.1']
    %9 = vsyncpa [#allocation3], 0
    %10 = vsyncpa [#allocation5], 0
    %s11 = scalar_lea.sflag [#allocation5], 1
    %12 = vsyncpa %s11, 0
    %13 = vsyncpa [#allocation8], 0
    %s14 = scalar_lea.sflag [#allocation8], 1
    %15 = vsyncpa %s14, 0
    loop: start=0, step=1, limit=4
    $region2: #{bottleneck_forward.1} parent=1 // loop_pre_header
      _
    $region3: #{bottleneck_forward.1} parent=1 // loop_header
      %s17 = sphi 0, %s21
      %p18 = scmp.ge.s32.totalorder %s17, 4
      %s25 = sphi 0, %s25
      %s27 = sphi 0, %s25
      %s28 = sphi 0, %s27
      %s42 = sphi 0, %s28
      %s48 = sphi 0, %s50
      %s51 = sphi 0, %s48
      %s52 = sphi 0, %s51
      %s68 = sphi 0, %s52
      %s74 = sphi 0, %s76
      %s77 = sphi 0, %s74
      %s78 = sphi 0, %s77
      %s94 = sphi 0, %s78
      %s100 = sphi 0, %s102
      %s103 = sphi 0, %s100
      %s104 = sphi 0, %s103
      %s120 = sphi 0, %s104
      %s126 = sphi 0, %s128
      %s129 = sphi 0, %s126
      %s130 = sphi 0, %s129
      %s146 = sphi 0, %s130
    $region4: #{bottleneck_forward.1} parent=1 // loop_header_branch
      %20 = sbr.rel (%p18) target = $region8
    $region5: #{bottleneck_forward.1} parent=1 // loop_body
      %s22 = ssub.s32 %s17, 1
      %s23 = ssub.s32 %s17, 2
      %s24 = sadd.s32 %s17, 1
      %s26 = sadd.s32 %s25, 1
      %p29 = scmp.eq.s32.totalorder %s17, 1
      %p30 = scmp.ne.s32.totalorder %s25, %s27
      %p31 = scmp.eq.s32.totalorder %s17, 0
      %p32 = por %p30, %p31
      %p33 = scmp.ne.s32.totalorder %s25, %s27
      %p34 = scmp.eq.s32.totalorder %s22, 1
      %p35 = por %p33, %p34
      %p36 = scmp.ne.s32.totalorder %s27, %s28
      %p37 = scmp.eq.s32.totalorder %s22, 0
      %p38 = por %p36, %p37
      %p39 = scmp.ne.s32.totalorder %s27, %s28
      %p40 = scmp.eq.s32.totalorder %s23, 1
      %p41 = por %p39, %p40
      %p43 = scmp.ne.s32.totalorder %s28, %s42
      %p44 = scmp.eq.s32.totalorder %s23, 0
      %p45 = por %p43, %p44
      %s46 = ssub.s32 %s17, %s24
      %p47 = scmp.eq.s32.totalorder %s46, 0
      %s49 = sadd.s32 %s48, 1
      %s50 = scalar_select %p47, %s48, %s49
      %p53 = pneg %p47
      %p54 = scmp.eq.s32.totalorder %s17, 1
      %p55 = por %p53, %p54
      %p56 = scmp.ne.s32.totalorder %s48, %s51
      %p57 = scmp.eq.s32.totalorder %s17, 0
      %p58 = por %p56, %p57
      %p59 = scmp.ne.s32.totalorder %s48, %s51
      %p60 = scmp.eq.s32.totalorder %s22, 1
      %p61 = por %p59, %p60
      %p62 = scmp.ne.s32.totalorder %s51, %s52
      %p63 = scmp.eq.s32.totalorder %s22, 0
      %p64 = por %p62, %p63
      %p65 = scmp.ne.s32.totalorder %s51, %s52
      %p66 = scmp.eq.s32.totalorder %s23, 1
      %p67 = por %p65, %p66
      %p69 = scmp.ne.s32.totalorder %s52, %s68
      %p70 = scmp.eq.s32.totalorder %s23, 0
      %p71 = por %p69, %p70
      %s72 = ssub.s32 %s17, %s24
      %p73 = scmp.eq.s32.totalorder %s72, 0
      %s75 = sadd.s32 %s74, 1
      %s76 = scalar_select %p73, %s74, %s75
      %p79 = pneg %p73
      %p80 = scmp.eq.s32.totalorder %s17, 1
      %p81 = por %p79, %p80
      %p82 = scmp.ne.s32.totalorder %s74, %s77
      %p83 = scmp.eq.s32.totalorder %s17, 0
      %p84 = por %p82, %p83
      %p85 = scmp.ne.s32.totalorder %s74, %s77
      %p86 = scmp.eq.s32.totalorder %s22, 1
      %p87 = por %p85, %p86
      %p88 = scmp.ne.s32.totalorder %s77, %s78
      %p89 = scmp.eq.s32.totalorder %s22, 0
      %p90 = por %p88, %p89
      %p91 = scmp.ne.s32.totalorder %s77, %s78
      %p92 = scmp.eq.s32.totalorder %s23, 1
      %p93 = por %p91, %p92
      %p95 = scmp.ne.s32.totalorder %s78, %s94
      %p96 = scmp.eq.s32.totalorder %s23, 0
      %p97 = por %p95, %p96
      %s98 = ssub.s32 %s17, %s24
      %p99 = scmp.eq.s32.totalorder %s98, 0
      %s101 = sadd.s32 %s100, 1
      %s102 = scalar_select %p99, %s100, %s101
      %p105 = pneg %p99
      %p106 = scmp.eq.s32.totalorder %s17, 1
      %p107 = por %p105, %p106
      %p108 = scmp.ne.s32.totalorder %s100, %s103
      %p109 = scmp.eq.s32.totalorder %s17, 0
      %p110 = por %p108, %p109
      %p111 = scmp.ne.s32.totalorder %s100, %s103
      %p112 = scmp.eq.s32.totalorder %s22, 1
      %p113 = por %p111, %p112
      %p114 = scmp.ne.s32.totalorder %s103, %s104
      %p115 = scmp.eq.s32.totalorder %s22, 0
      %p116 = por %p114, %p115
      %p117 = scmp.ne.s32.totalorder %s103, %s104
      %p118 = scmp.eq.s32.totalorder %s23, 1
      %p119 = por %p117, %p118
      %p121 = scmp.ne.s32.totalorder %s104, %s120
      %p122 = scmp.eq.s32.totalorder %s23, 0
      %p123 = por %p121, %p122
      %s124 = ssub.s32 %s17, %s24
      %p125 = scmp.eq.s32.totalorder %s124, 0
      %s127 = sadd.s32 %s126, 1
      %s128 = scalar_select %p125, %s126, %s127
      %p131 = pneg %p125
      %p132 = scmp.eq.s32.totalorder %s17, 1
      %p133 = por %p131, %p132
      %p134 = scmp.ne.s32.totalorder %s126, %s129
      %p135 = scmp.eq.s32.totalorder %s17, 0
      %p136 = por %p134, %p135
      %p137 = scmp.ne.s32.totalorder %s126, %s129
      %p138 = scmp.eq.s32.totalorder %s22, 1
      %p139 = por %p137, %p138
      %p140 = scmp.ne.s32.totalorder %s129, %s130
      %p141 = scmp.eq.s32.totalorder %s22, 0
      %p142 = por %p140, %p141
      %p143 = scmp.ne.s32.totalorder %s129, %s130
      %p144 = scmp.eq.s32.totalorder %s23, 1
      %p145 = por %p143, %p144
      %p147 = scmp.ne.s32.totalorder %s130, %s146
      %p148 = scmp.eq.s32.totalorder %s23, 0
      %p149 = por %p147, %p148
      %p150 = scmp.le.s32.totalorder 1, %s17
      %p151 = scmp.lt.s32.totalorder %s17, 3
      %p152 = pnand %p150, %p151
      %p153 = pneg %p152
      // Predicated region
      $region9: #{bottleneck_forward.1} parent=5 // pred_check
        _
      $region10: #{bottleneck_forward.1} parent=5 // pred_check_branch
        %155 = sbr.rel (%p152) target = $region12
      $region11: #{bottleneck_forward.1} parent=5 // pred_region
        %s156 = ssub.s32 %s17, 1
        // Predicated region
        $region13: #{bottleneck_forward.1} parent=11 // pred_check
          %p157 = pneg %p38
        $region14: #{bottleneck_forward.1} parent=11 // pred_check_branch
          %159 = sbr.rel (%p157) target = $region16
        $region15: #{bottleneck_forward.1} parent=11 // pred_region
          %161 = vsyncadd [#allocation3], 0
          %s163 = sshll.u32 %s0, 4
          %s164 = int_to_ptr.hbm [resolvable:$true] %s163
          %s165 = sshll.u32 [#allocation2], 4
          %s166 = int_to_ptr.vmem [resolvable:$true] %s165
          %168 = dma.hbm_to_vmem [thread:$0]  %s164, 256, %s166, [#allocation3]
        $region16: #{bottleneck_forward.1} parent=11 // pred_fallthru
          _
      $region12: #{bottleneck_forward.1} parent=5 // pred_fallthru
        _
      %p169 = scmp.lt.s32.totalorder %s17, 2
      // Predicated region
      $region17: #{bottleneck_forward.1} parent=5 // pred_check
        %p170 = pneg %p169
      $region18: #{bottleneck_forward.1} parent=5 // pred_check_branch
        %172 = sbr.rel (%p170) target = $region20
      $region19: #{bottleneck_forward.1} parent=5 // pred_region
        // Predicated region
        $region21: #{bottleneck_forward.1} parent=19 // pred_check
          %p173 = pneg %p58
        $region22: #{bottleneck_forward.1} parent=19 // pred_check_branch
          %175 = sbr.rel (%p173) target = $region24
        $region23: #{bottleneck_forward.1} parent=19 // pred_region
          %s176 = sand.u32 %s17, 1
          %s177 = scalar_lea.sflag [#allocation5], %s176
          %s178 = sand.u32 %s48, 1
          %s179 = smul.addr %s178, 512
          %s180 = scalar_lea.vmem [#allocation4], %s179
          %s181 = smul.u32 2, %s17
          %183 = vsyncadd %s177, 0
          %s184 = smul.addr %s181, 4
          %s185 = scalar_lea.hbm %s1, %s184
          %s186 = sshll.u32 %s185, 4
          %s187 = int_to_ptr.hbm [resolvable:$true] %s186
          %s188 = sshll.u32 %s180, 4
          %s189 = int_to_ptr.vmem [resolvable:$true] %s188
          %194 = dma.hbm_to_vmem [thread:$0]  %s187, 8192, %s189, %s177, 256, 128, 8
        $region24: #{bottleneck_forward.1} parent=19 // pred_fallthru
          _
        // Predicated region
        $region25: #{bottleneck_forward.1} parent=19 // pred_check
          %p195 = pneg %p84
        $region26: #{bottleneck_forward.1} parent=19 // pred_check_branch
          %197 = sbr.rel (%p195) target = $region28
        $region27: #{bottleneck_forward.1} parent=19 // pred_region
          %s198 = sand.u32 %s17, 1
          %s199 = scalar_lea.sflag [#allocation5], %s198
          %s200 = sand.u32 %s74, 1
          %s201 = smul.addr %s200, 2
          %s202 = scalar_lea.vmem [#allocation6], %s201
          %s203 = smul.u32 2, %s17
          %205 = vsyncadd %s199, 0
          %s206 = scalar_lea.hbm %s2, %s203
          %s208 = sshll.u32 %s206, 4
          %s209 = int_to_ptr.hbm [resolvable:$true] %s208
          %s210 = sshll.u32 %s202, 4
          %s211 = int_to_ptr.vmem [resolvable:$true] %s210
          %213 = dma.hbm_to_vmem [thread:$0]  %s209, 32, %s211, %s199
        $region28: #{bottleneck_forward.1} parent=19 // pred_fallthru
          _
        // Predicated region
        $region29: #{bottleneck_forward.1} parent=19 // pred_check
          %p214 = pneg %p110
        $region30: #{bottleneck_forward.1} parent=19 // pred_check_branch
          %216 = sbr.rel (%p214) target = $region32
        $region31: #{bottleneck_forward.1} parent=19 // pred_region
          %s217 = sand.u32 %s100, 1
          %s218 = scalar_lea.sflag [#allocation8], %s217
          %s219 = sand.u32 %s100, 1
          %s220 = smul.addr %s219, 256
          %s221 = scalar_lea.vmem [#allocation7], %s220
          %s222 = smul.u32 32, %s17
          %224 = vsyncadd %s218, 0
          %s225 = smul.addr %s222, 2
          %s226 = smul.addr %s225, 4
          %s227 = scalar_lea.hbm %s3, %s226
          %s228 = sshll.u32 %s227, 4
          %s229 = int_to_ptr.hbm [resolvable:$true] %s228
          %s230 = sshll.u32 %s221, 4
          %s231 = int_to_ptr.vmem [resolvable:$true] %s230
          %236 = dma.hbm_to_vmem [thread:$0]  %s229, 4096, %s231, %s218, 128, 128, 8
        $region32: #{bottleneck_forward.1} parent=19 // pred_fallthru
          _
      $region20: #{bottleneck_forward.1} parent=5 // pred_fallthru
        _
      %p237 = scmp.le.s32.totalorder 1, %s17
      %p238 = scmp.lt.s32.totalorder %s17, 3
      %p239 = pnand %p237, %p238
      %p240 = pneg %p239
      // Predicated region
      $region33: #{bottleneck_forward.1} parent=5 // pred_check
        _
      $region34: #{bottleneck_forward.1} parent=5 // pred_check_branch
        %242 = sbr.rel (%p239) target = $region36
      $region35: #{bottleneck_forward.1} parent=5 // pred_region
        %s243 = ssub.s32 %s17, 1
        // Predicated region
        $region37: #{bottleneck_forward.1} parent=35 // pred_check
          %p244 = pneg %p38
        $region38: #{bottleneck_forward.1} parent=35 // pred_check_branch
          %246 = sbr.rel (%p244) target = $region40
        $region39: #{bottleneck_forward.1} parent=35 // pred_region
          %248 = dma.done [#allocation3], 256
        $region40: #{bottleneck_forward.1} parent=35 // pred_fallthru
          _
        %s249 = sand.u32 %s22, 1
        %s250 = scalar_lea.sflag [#allocation5], %s249
        %s251 = sand.u32 %s51, 1
        %s252 = smul.addr %s251, 512
        %s253 = scalar_lea.vmem [#allocation4], %s252
        // Predicated region
        $region41: #{bottleneck_forward.1} parent=35 // pred_check
          %p254 = pneg %p64
        $region42: #{bottleneck_forward.1} parent=35 // pred_check_branch
          %256 = sbr.rel (%p254) target = $region44
        $region43: #{bottleneck_forward.1} parent=35 // pred_region
          %258 = dma.done %s250, 8192
        $region44: #{bottleneck_forward.1} parent=35 // pred_fallthru
          _
        %s259 = sand.u32 %s22, 1
        %s260 = scalar_lea.sflag [#allocation5], %s259
        %s261 = sand.u32 %s77, 1
        %s262 = smul.addr %s261, 2
        %s263 = scalar_lea.vmem [#allocation6], %s262
        // Predicated region
        $region45: #{bottleneck_forward.1} parent=35 // pred_check
          %p264 = pneg %p90
        $region46: #{bottleneck_forward.1} parent=35 // pred_check_branch
          %266 = sbr.rel (%p264) target = $region48
        $region47: #{bottleneck_forward.1} parent=35 // pred_region
          %268 = dma.done %s260, 32
        $region48: #{bottleneck_forward.1} parent=35 // pred_fallthru
          _
        %s269 = sand.u32 %s103, 1
        %s270 = scalar_lea.sflag [#allocation8], %s269
        %s271 = sand.u32 %s103, 1
        %s272 = smul.addr %s271, 256
        %s273 = scalar_lea.vmem [#allocation7], %s272
        // Predicated region
        $region49: #{bottleneck_forward.1} parent=35 // pred_check
          %p274 = pneg %p116
        $region50: #{bottleneck_forward.1} parent=35 // pred_check_branch
          %276 = sbr.rel (%p274) target = $region52
        $region51: #{bottleneck_forward.1} parent=35 // pred_region
          %278 = dma.done %s270, 4096
        $region52: #{bottleneck_forward.1} parent=35 // pred_fallthru
          _
        %p279 = pneg %p38
        %p280 = pneg %p35
        %s281 = sand.u32 %s22, 1
        %s282 = scalar_lea.sflag [#allocation5], %s281
        %s283 = sand.u32 %s51, 1
        %s284 = smul.addr %s283, 512
        %s285 = scalar_lea.vmem [#allocation4], %s284
        %p286 = pneg %p64
        %p287 = pneg %p61
        %s288 = sand.u32 %s22, 1
        %s289 = scalar_lea.sflag [#allocation5], %s288
        %s290 = sand.u32 %s77, 1
        %s291 = smul.addr %s290, 2
        %s292 = scalar_lea.vmem [#allocation6], %s291
        %p293 = pneg %p90
        %p294 = pneg %p87
        %s295 = sand.u32 %s103, 1
        %s296 = scalar_lea.sflag [#allocation8], %s295
        %s297 = sand.u32 %s103, 1
        %s298 = smul.addr %s297, 256
        %s299 = scalar_lea.vmem [#allocation7], %s298
        %p300 = pneg %p116
        %p301 = pneg %p113
        %p302 = pneg %p142
        %p303 = pneg %p139
        %p304 = scmp.lt.s32.totalorder %s22, 1
        %s305 = scalar_select %p304, %s22, 1
        %s306 = smul.addr %s305, 2
        %s307 = smul.addr %s306, 8
        %s308 = scalar_lea.vmem %s4, %s307
        %s309 = smul.u32 2, %s22
        %s310 = smul.u32 2, %s22
        %s311 = smul.u32 32, %s22
        %p312 = scmp.lt.s32.totalorder %s22, 1
        %s313 = scalar_select %p312, %s22, 1
        %s314 = smul.addr %s313, 2
        %s315 = smul.addr %s314, 8
        %s316 = scalar_lea.vmem %s4, %s315
        %v317 = vld [vmem:[#allocation2] sm:$0xff]
        %v318 = vld [vmem:[#allocation2 + $0x8] sm:$0xff]
        %v319 = vld [vmem:[%s253] sm:$0xff]
        %v320 = vld [vmem:[%s253 + $0x8] sm:$0xff]
        %v321 = vld [vmem:[%s253 + $0x10] sm:$0xff]
        %v322 = vld [vmem:[%s253 + $0x18] sm:$0xff]
        %v323 = vld [vmem:[%s253 + $0x20] sm:$0xff]
        %v324 = vld [vmem:[%s253 + $0x28] sm:$0xff]
        %v325 = vld [vmem:[%s253 + $0x30] sm:$0xff]
        %v326 = vld [vmem:[%s253 + $0x38] sm:$0xff]
        %v327 = vld [vmem:[%s253 + $0x40] sm:$0xff]
        %v328 = vld [vmem:[%s253 + $0x48] sm:$0xff]
        %v329 = vld [vmem:[%s253 + $0x50] sm:$0xff]
        %v330 = vld [vmem:[%s253 + $0x58] sm:$0xff]
        %v331 = vld [vmem:[%s253 + $0x60] sm:$0xff]
        %v332 = vld [vmem:[%s253 + $0x68] sm:$0xff]
        %v333 = vld [vmem:[%s253 + $0x70] sm:$0xff]
        %v334 = vld [vmem:[%s253 + $0x78] sm:$0xff]
        %v335 = vld [vmem:[%s253 + $0x80] sm:$0xff]
        %v336 = vld [vmem:[%s253 + $0x88] sm:$0xff]
        %v337 = vld [vmem:[%s253 + $0x90] sm:$0xff]
        %v338 = vld [vmem:[%s253 + $0x98] sm:$0xff]
        %v339 = vld [vmem:[%s253 + $0xa0] sm:$0xff]
        %v340 = vld [vmem:[%s253 + $0xa8] sm:$0xff]
        %v341 = vld [vmem:[%s253 + $0xb0] sm:$0xff]
        %v342 = vld [vmem:[%s253 + $0xb8] sm:$0xff]
        %v343 = vld [vmem:[%s253 + $0xc0] sm:$0xff]
        %v344 = vld [vmem:[%s253 + $0xc8] sm:$0xff]
        %v345 = vld [vmem:[%s253 + $0xd0] sm:$0xff]
        %v346 = vld [vmem:[%s253 + $0xd8] sm:$0xff]
        %v347 = vld [vmem:[%s253 + $0xe0] sm:$0xff]
        %v348 = vld [vmem:[%s253 + $0xe8] sm:$0xff]
        %v349 = vld [vmem:[%s253 + $0xf0] sm:$0xff]
        %v350 = vld [vmem:[%s253 + $0xf8] sm:$0xff]
        %v351 = vld [vmem:[%s253 + $0x100] sm:$0xff]
        %v352 = vld [vmem:[%s253 + $0x108] sm:$0xff]
        %v353 = vld [vmem:[%s253 + $0x110] sm:$0xff]
        %v354 = vld [vmem:[%s253 + $0x118] sm:$0xff]
        %v355 = vld [vmem:[%s253 + $0x120] sm:$0xff]
        %v356 = vld [vmem:[%s253 + $0x128] sm:$0xff]
        %v357 = vld [vmem:[%s253 + $0x130] sm:$0xff]
        %v358 = vld [vmem:[%s253 + $0x138] sm:$0xff]
        %v359 = vld [vmem:[%s253 + $0x140] sm:$0xff]
        %v360 = vld [vmem:[%s253 + $0x148] sm:$0xff]
        %v361 = vld [vmem:[%s253 + $0x150] sm:$0xff]
        %v362 = vld [vmem:[%s253 + $0x158] sm:$0xff]
        %v363 = vld [vmem:[%s253 + $0x160] sm:$0xff]
        %v364 = vld [vmem:[%s253 + $0x168] sm:$0xff]
        %v365 = vld [vmem:[%s253 + $0x170] sm:$0xff]
        %v366 = vld [vmem:[%s253 + $0x178] sm:$0xff]
        %v367 = vld [vmem:[%s253 + $0x180] sm:$0xff]
        %v368 = vld [vmem:[%s253 + $0x188] sm:$0xff]
        %v369 = vld [vmem:[%s253 + $0x190] sm:$0xff]
        %v370 = vld [vmem:[%s253 + $0x198] sm:$0xff]
        %v371 = vld [vmem:[%s253 + $0x1a0] sm:$0xff]
        %v372 = vld [vmem:[%s253 + $0x1a8] sm:$0xff]
        %v373 = vld [vmem:[%s253 + $0x1b0] sm:$0xff]
        %v374 = vld [vmem:[%s253 + $0x1b8] sm:$0xff]
        %v375 = vld [vmem:[%s253 + $0x1c0] sm:$0xff]
        %v376 = vld [vmem:[%s253 + $0x1c8] sm:$0xff]
        %v377 = vld [vmem:[%s253 + $0x1d0] sm:$0xff]
        %v378 = vld [vmem:[%s253 + $0x1d8] sm:$0xff]
        %v379 = vld [vmem:[%s253 + $0x1e0] sm:$0xff]
        %v380 = vld [vmem:[%s253 + $0x1e8] sm:$0xff]
        %v381 = vld [vmem:[%s253 + $0x1f0] sm:$0xff]
        %v382 = vld [vmem:[%s253 + $0x1f8] sm:$0xff]
        %v383 = vld [vmem:[%s263] sm:$0x3]
        %v385 = vperm.slane %v383, 0
        %v386 = vperm.slane %v383, 1
        %v391 = vunpack.c.l.b16 %v317
        %v392 = vunpack.c.h.b16 %v317
        %v393 = vunpack.c.l.b16 %v318
        %v394 = vunpack.c.h.b16 %v318
        %v395 = vpack.c.b16 %v391, %v391
        %v396 = vpack.c.b16 %v392, %v392
        %v397 = vpack.c.b16 %v393, %v393
        %v398 = vpack.c.b16 %v394, %v394
        %v467 = vunpack.c.l.b16 %v319
        %v468 = vunpack.c.h.b16 %v319
        %v469 = vunpack.c.l.b16 %v320
        %v470 = vunpack.c.h.b16 %v320
        %v471 = vunpack.c.l.b16 %v321
        %v472 = vunpack.c.h.b16 %v321
        %v473 = vunpack.c.l.b16 %v322
        %v474 = vunpack.c.h.b16 %v322
        %v475 = vunpack.c.l.b16 %v323
        %v476 = vunpack.c.h.b16 %v323
        %v477 = vunpack.c.l.b16 %v324
        %v478 = vunpack.c.h.b16 %v324
        %v479 = vunpack.c.l.b16 %v325
        %v480 = vunpack.c.h.b16 %v325
        %v481 = vunpack.c.l.b16 %v326
        %v482 = vunpack.c.h.b16 %v326
        %v483 = vunpack.c.l.b16 %v327
        %v484 = vunpack.c.h.b16 %v327
        %v485 = vunpack.c.l.b16 %v328
        %v486 = vunpack.c.h.b16 %v328
        %v487 = vunpack.c.l.b16 %v329
        %v488 = vunpack.c.h.b16 %v329
        %v489 = vunpack.c.l.b16 %v330
        %v490 = vunpack.c.h.b16 %v330
        %v491 = vunpack.c.l.b16 %v331
        %v492 = vunpack.c.h.b16 %v331
        %v493 = vunpack.c.l.b16 %v332
        %v494 = vunpack.c.h.b16 %v332
        %v495 = vunpack.c.l.b16 %v333
        %v496 = vunpack.c.h.b16 %v333
        %v497 = vunpack.c.l.b16 %v334
        %v498 = vunpack.c.h.b16 %v334
        %v499 = vunpack.c.l.b16 %v335
        %v500 = vunpack.c.h.b16 %v335
        %v501 = vunpack.c.l.b16 %v336
        %v502 = vunpack.c.h.b16 %v336
        %v503 = vunpack.c.l.b16 %v337
        %v504 = vunpack.c.h.b16 %v337
        %v505 = vunpack.c.l.b16 %v338
        %v506 = vunpack.c.h.b16 %v338
        %v507 = vunpack.c.l.b16 %v339
        %v508 = vunpack.c.h.b16 %v339
        %v509 = vunpack.c.l.b16 %v340
        %v510 = vunpack.c.h.b16 %v340
        %v511 = vunpack.c.l.b16 %v341
        %v512 = vunpack.c.h.b16 %v341
        %v513 = vunpack.c.l.b16 %v342
        %v514 = vunpack.c.h.b16 %v342
        %v515 = vunpack.c.l.b16 %v343
        %v516 = vunpack.c.h.b16 %v343
        %v517 = vunpack.c.l.b16 %v344
        %v518 = vunpack.c.h.b16 %v344
        %v519 = vunpack.c.l.b16 %v345
        %v520 = vunpack.c.h.b16 %v345
        %v521 = vunpack.c.l.b16 %v346
        %v522 = vunpack.c.h.b16 %v346
        %v523 = vunpack.c.l.b16 %v347
        %v524 = vunpack.c.h.b16 %v347
        %v525 = vunpack.c.l.b16 %v348
        %v526 = vunpack.c.h.b16 %v348
        %v527 = vunpack.c.l.b16 %v349
        %v528 = vunpack.c.h.b16 %v349
        %v529 = vunpack.c.l.b16 %v350
        %v530 = vunpack.c.h.b16 %v350
        %v531 = vunpack.c.l.b16 %v351
        %v532 = vunpack.c.h.b16 %v351
        %v533 = vunpack.c.l.b16 %v352
        %v534 = vunpack.c.h.b16 %v352
        %v535 = vunpack.c.l.b16 %v353
        %v536 = vunpack.c.h.b16 %v353
        %v537 = vunpack.c.l.b16 %v354
        %v538 = vunpack.c.h.b16 %v354
        %v539 = vunpack.c.l.b16 %v355
        %v540 = vunpack.c.h.b16 %v355
        %v541 = vunpack.c.l.b16 %v356
        %v542 = vunpack.c.h.b16 %v356
        %v543 = vunpack.c.l.b16 %v357
        %v544 = vunpack.c.h.b16 %v357
        %v545 = vunpack.c.l.b16 %v358
        %v546 = vunpack.c.h.b16 %v358
        %v547 = vunpack.c.l.b16 %v359
        %v548 = vunpack.c.h.b16 %v359
        %v549 = vunpack.c.l.b16 %v360
        %v550 = vunpack.c.h.b16 %v360
        %v551 = vunpack.c.l.b16 %v361
        %v552 = vunpack.c.h.b16 %v361
        %v553 = vunpack.c.l.b16 %v362
        %v554 = vunpack.c.h.b16 %v362
        %v555 = vunpack.c.l.b16 %v363
        %v556 = vunpack.c.h.b16 %v363
        %v557 = vunpack.c.l.b16 %v364
        %v558 = vunpack.c.h.b16 %v364
        %v559 = vunpack.c.l.b16 %v365
        %v560 = vunpack.c.h.b16 %v365
        %v561 = vunpack.c.l.b16 %v366
        %v562 = vunpack.c.h.b16 %v366
        %v563 = vunpack.c.l.b16 %v367
        %v564 = vunpack.c.h.b16 %v367
        %v565 = vunpack.c.l.b16 %v368
        %v566 = vunpack.c.h.b16 %v368
        %v567 = vunpack.c.l.b16 %v369
        %v568 = vunpack.c.h.b16 %v369
        %v569 = vunpack.c.l.b16 %v370
        %v570 = vunpack.c.h.b16 %v370
        %v571 = vunpack.c.l.b16 %v371
        %v572 = vunpack.c.h.b16 %v371
        %v573 = vunpack.c.l.b16 %v372
        %v574 = vunpack.c.h.b16 %v372
        %v575 = vunpack.c.l.b16 %v373
        %v576 = vunpack.c.h.b16 %v373
        %v577 = vunpack.c.l.b16 %v374
        %v578 = vunpack.c.h.b16 %v374
        %v579 = vunpack.c.l.b16 %v375
        %v580 = vunpack.c.h.b16 %v375
        %v581 = vunpack.c.l.b16 %v376
        %v582 = vunpack.c.h.b16 %v376
        %v583 = vunpack.c.l.b16 %v377
        %v584 = vunpack.c.h.b16 %v377
        %v585 = vunpack.c.l.b16 %v378
        %v586 = vunpack.c.h.b16 %v378
        %v587 = vunpack.c.l.b16 %v379
        %v588 = vunpack.c.h.b16 %v379
        %v589 = vunpack.c.l.b16 %v380
        %v590 = vunpack.c.h.b16 %v380
        %v591 = vunpack.c.l.b16 %v381
        %v592 = vunpack.c.h.b16 %v381
        %v593 = vunpack.c.l.b16 %v382
        %v594 = vunpack.c.h.b16 %v382
        %v595 = vpack.c.b16 %v469, %v467
        %v596 = vpack.c.b16 %v470, %v468
        %v597 = vpack.c.b16 %v473, %v471
        %v598 = vpack.c.b16 %v474, %v472
        %v599 = vpack.c.b16 %v477, %v475
        %v600 = vpack.c.b16 %v478, %v476
        %v601 = vpack.c.b16 %v481, %v479
        %v602 = vpack.c.b16 %v482, %v480
        %v603 = vpack.c.b16 %v485, %v483
        %v604 = vpack.c.b16 %v486, %v484
        %v605 = vpack.c.b16 %v489, %v487
        %v606 = vpack.c.b16 %v490, %v488
        %v607 = vpack.c.b16 %v493, %v491
        %v608 = vpack.c.b16 %v494, %v492
        %v609 = vpack.c.b16 %v497, %v495
        %v610 = vpack.c.b16 %v498, %v496
        %v611 = vpack.c.b16 %v501, %v499
        %v612 = vpack.c.b16 %v502, %v500
        %v613 = vpack.c.b16 %v505, %v503
        %v614 = vpack.c.b16 %v506, %v504
        %v615 = vpack.c.b16 %v509, %v507
        %v616 = vpack.c.b16 %v510, %v508
        %v617 = vpack.c.b16 %v513, %v511
        %v618 = vpack.c.b16 %v514, %v512
        %v619 = vpack.c.b16 %v517, %v515
        %v620 = vpack.c.b16 %v518, %v516
        %v621 = vpack.c.b16 %v521, %v519
        %v622 = vpack.c.b16 %v522, %v520
        %v623 = vpack.c.b16 %v525, %v523
        %v624 = vpack.c.b16 %v526, %v524
        %v625 = vpack.c.b16 %v529, %v527
        %v626 = vpack.c.b16 %v530, %v528
        %v627 = vpack.c.b16 %v533, %v531
        %v628 = vpack.c.b16 %v534, %v532
        %v629 = vpack.c.b16 %v537, %v535
        %v630 = vpack.c.b16 %v538, %v536
        %v631 = vpack.c.b16 %v541, %v539
        %v632 = vpack.c.b16 %v542, %v540
        %v633 = vpack.c.b16 %v545, %v543
        %v634 = vpack.c.b16 %v546, %v544
        %v635 = vpack.c.b16 %v549, %v547
        %v636 = vpack.c.b16 %v550, %v548
        %v637 = vpack.c.b16 %v553, %v551
        %v638 = vpack.c.b16 %v554, %v552
        %v639 = vpack.c.b16 %v557, %v555
        %v640 = vpack.c.b16 %v558, %v556
        %v641 = vpack.c.b16 %v561, %v559
        %v642 = vpack.c.b16 %v562, %v560
        %v643 = vpack.c.b16 %v565, %v563
        %v644 = vpack.c.b16 %v566, %v564
        %v645 = vpack.c.b16 %v569, %v567
        %v646 = vpack.c.b16 %v570, %v568
        %v647 = vpack.c.b16 %v573, %v571
        %v648 = vpack.c.b16 %v574, %v572
        %v649 = vpack.c.b16 %v577, %v575
        %v650 = vpack.c.b16 %v578, %v576
        %v651 = vpack.c.b16 %v581, %v579
        %v652 = vpack.c.b16 %v582, %v580
        %v653 = vpack.c.b16 %v585, %v583
        %v654 = vpack.c.b16 %v586, %v584
        %v655 = vpack.c.b16 %v589, %v587
        %v656 = vpack.c.b16 %v590, %v588
        %v657 = vpack.c.b16 %v593, %v591
        %v658 = vpack.c.b16 %v594, %v592
        %723 = vmatpush.bf16.msra.mxu0 %v609
        %724 = vmatpush.bf16.msra.mxu0 %v607
        %725 = vmatpush.bf16.msra.mxu0 %v605
        %726 = vmatpush.bf16.msra.mxu0 %v603
        %727 = vmatpush.bf16.msra.mxu0 %v601
        %728 = vmatpush.bf16.msra.mxu0 %v599
        %729 = vmatpush.bf16.msra.mxu0 %v597
        %730 = vmatpush.bf16.msra.mxu0 %v595
        %731 = vmatmul.bf16.gmra.mxu0 %v395
        %v732 = vpop.f32.mrf.mxu0
        %v733 = vadd.f32 %v385, %v732
        %v734 = vpop.f32.mrf.mxu0
        %735 = vdwg.mxu0
        %736 = vmatpush.bf16.msra.mxu0 %v625
        %737 = vmatpush.bf16.msra.mxu0 %v623
        %738 = vmatpush.bf16.msra.mxu0 %v621
        %739 = vmatpush.bf16.msra.mxu0 %v619
        %740 = vmatpush.bf16.msra.mxu0 %v617
        %741 = vmatpush.bf16.msra.mxu0 %v615
        %742 = vmatpush.bf16.msra.mxu0 %v613
        %743 = vmatpush.bf16.msra.mxu0 %v611
        %744 = vmatmul.bf16.gmra.mxu0 %v396
        %v745 = vpop.f32.mrf.mxu0
        %v746 = vadd.f32 %v733, %v745
        %v747 = vpop.f32.mrf.mxu0
        %748 = vdwg.mxu0
        %749 = vmatpush.bf16.msra.mxu0 %v641
        %750 = vmatpush.bf16.msra.mxu0 %v639
        %751 = vmatpush.bf16.msra.mxu0 %v637
        %752 = vmatpush.bf16.msra.mxu0 %v635
        %753 = vmatpush.bf16.msra.mxu0 %v633
        %754 = vmatpush.bf16.msra.mxu0 %v631
        %755 = vmatpush.bf16.msra.mxu0 %v629
        %756 = vmatpush.bf16.msra.mxu0 %v627
        %757 = vmatmul.bf16.gmra.mxu0 %v397
        %v758 = vpop.f32.mrf.mxu0
        %v759 = vadd.f32 %v746, %v758
        %v760 = vpop.f32.mrf.mxu0
        %761 = vdwg.mxu0
        %762 = vmatpush.bf16.msra.mxu0 %v657
        %763 = vmatpush.bf16.msra.mxu0 %v655
        %764 = vmatpush.bf16.msra.mxu0 %v653
        %765 = vmatpush.bf16.msra.mxu0 %v651
        %766 = vmatpush.bf16.msra.mxu0 %v649
        %767 = vmatpush.bf16.msra.mxu0 %v647
        %768 = vmatpush.bf16.msra.mxu0 %v645
        %769 = vmatpush.bf16.msra.mxu0 %v643
        %770 = vmatmul.bf16.gmra.mxu0 %v398
        %v771 = vpop.f32.mrf.mxu0
        %v772 = vadd.f32 %v759, %v771
        %v773 = vpop.f32.mrf.mxu0
        %774 = vdwg.mxu0
        %775 = vmatpush.bf16.msra.mxu0 %v610
        %776 = vmatpush.bf16.msra.mxu0 %v608
        %777 = vmatpush.bf16.msra.mxu0 %v606
        %778 = vmatpush.bf16.msra.mxu0 %v604
        %779 = vmatpush.bf16.msra.mxu0 %v602
        %780 = vmatpush.bf16.msra.mxu0 %v600
        %781 = vmatpush.bf16.msra.mxu0 %v598
        %782 = vmatpush.bf16.msra.mxu0 %v596
        %783 = vmatmul.bf16.gmra.mxu0 %v395
        %v784 = vpop.f32.mrf.mxu0
        %v785 = vadd.f32 %v386, %v784
        %v786 = vpop.f32.mrf.mxu0
        %787 = vdwg.mxu0
        %788 = vmatpush.bf16.msra.mxu0 %v626
        %789 = vmatpush.bf16.msra.mxu0 %v624
        %790 = vmatpush.bf16.msra.mxu0 %v622
        %791 = vmatpush.bf16.msra.mxu0 %v620
        %792 = vmatpush.bf16.msra.mxu0 %v618
        %793 = vmatpush.bf16.msra.mxu0 %v616
        %794 = vmatpush.bf16.msra.mxu0 %v614
        %795 = vmatpush.bf16.msra.mxu0 %v612
        %796 = vmatmul.bf16.gmra.mxu0 %v396
        %v797 = vpop.f32.mrf.mxu0
        %v798 = vadd.f32 %v785, %v797
        %v799 = vpop.f32.mrf.mxu0
        %800 = vdwg.mxu0
        %801 = vmatpush.bf16.msra.mxu0 %v642
        %802 = vmatpush.bf16.msra.mxu0 %v640
        %803 = vmatpush.bf16.msra.mxu0 %v638
        %804 = vmatpush.bf16.msra.mxu0 %v636
        %805 = vmatpush.bf16.msra.mxu0 %v634
        %806 = vmatpush.bf16.msra.mxu0 %v632
        %807 = vmatpush.bf16.msra.mxu0 %v630
        %808 = vmatpush.bf16.msra.mxu0 %v628
        %809 = vmatmul.bf16.gmra.mxu0 %v397
        %v810 = vpop.f32.mrf.mxu0
        %v811 = vadd.f32 %v798, %v810
        %v812 = vpop.f32.mrf.mxu0
        %813 = vdwg.mxu0
        %814 = vmatpush.bf16.msra.mxu0 %v658
        %815 = vmatpush.bf16.msra.mxu0 %v656
        %816 = vmatpush.bf16.msra.mxu0 %v654
        %817 = vmatpush.bf16.msra.mxu0 %v652
        %818 = vmatpush.bf16.msra.mxu0 %v650
        %819 = vmatpush.bf16.msra.mxu0 %v648
        %820 = vmatpush.bf16.msra.mxu0 %v646
        %821 = vmatpush.bf16.msra.mxu0 %v644
        %822 = vmatmul.bf16.gmra.mxu0 %v398
        %v823 = vpop.f32.mrf.mxu0
        %v824 = vadd.f32 %v811, %v823
        %v825 = vpop.f32.mrf.mxu0
        %826 = vdwg.mxu0
        %v827 = vxor.u32 %v772, 2147483648
        %v828 = vxor.u32 %v824, 2147483648
        %v829 = vmul.f32 %v827, 1.442695
        %v830 = vpow.pop %v829
        %v831 = vmul.f32 %v828, 1.442695
        %v832 = vpow.pop %v831
        %v833 = vadd.f32 %v830, 1.0
        %v834 = vadd.f32 %v832, 1.0
        %v835 = vrcp.pop %v833
        %v836 = vmul.f32 %v833, %v835
        %v837 = vsub.f32 1.0, %v836
        %v838 = vmul.f32 %v835, %v837
        %v839 = vadd.f32 %v835, %v838
        %vm840 = vweird.f32 %v833
        %vm841 = vweird.f32 %v835
        %vm842 = vmor %vm840, %vm841
        %v843 = vsel %vm842, %v835, %v839
        %v844 = vand.u32 2147483647, %v833
        %vm845 = vcmp.eq.f32.partialorder %v844, 8.507059e+37
        %v846 = vand.u32 %v833, 2147483648
        %v847 = vor.u32 1.1754944e-38, %v846
        %v848 = vsel %vm845, %v847, %v843
        %v849 = vmul.f32 1.0, %v848
        %v850 = vrcp.pop %v834
        %v851 = vmul.f32 %v834, %v850
        %v852 = vsub.f32 1.0, %v851
        %v853 = vmul.f32 %v850, %v852
        %v854 = vadd.f32 %v850, %v853
        %vm855 = vweird.f32 %v834
        %vm856 = vweird.f32 %v850
        %vm857 = vmor %vm855, %vm856
        %v858 = vsel %vm857, %v850, %v854
        %v859 = vand.u32 2147483647, %v834
        %vm860 = vcmp.eq.f32.partialorder %v859, 8.507059e+37
        %v861 = vand.u32 %v834, 2147483648
        %v862 = vor.u32 1.1754944e-38, %v861
        %v863 = vsel %vm860, %v862, %v858
        %v864 = vmul.f32 1.0, %v863
        %v865 = vpack.c.bf16 %v849, %v849
        %v866 = vpack.c.bf16 %v864, %v864
        %v867 = vld [vmem:[%s273] sm:$0xff]
        %v868 = vld [vmem:[%s273 + $0x8] sm:$0xff]
        %v869 = vld [vmem:[%s273 + $0x10] sm:$0xff]
        %v870 = vld [vmem:[%s273 + $0x18] sm:$0xff]
        %v871 = vld [vmem:[%s273 + $0x20] sm:$0xff]
        %v872 = vld [vmem:[%s273 + $0x28] sm:$0xff]
        %v873 = vld [vmem:[%s273 + $0x30] sm:$0xff]
        %v874 = vld [vmem:[%s273 + $0x38] sm:$0xff]
        %v875 = vld [vmem:[%s273 + $0x40] sm:$0xff]
        %v876 = vld [vmem:[%s273 + $0x48] sm:$0xff]
        %v877 = vld [vmem:[%s273 + $0x50] sm:$0xff]
        %v878 = vld [vmem:[%s273 + $0x58] sm:$0xff]
        %v879 = vld [vmem:[%s273 + $0x60] sm:$0xff]
        %v880 = vld [vmem:[%s273 + $0x68] sm:$0xff]
        %v881 = vld [vmem:[%s273 + $0x70] sm:$0xff]
        %v882 = vld [vmem:[%s273 + $0x78] sm:$0xff]
        %v883 = vld [vmem:[%s273 + $0x80] sm:$0xff]
        %v884 = vld [vmem:[%s273 + $0x88] sm:$0xff]
        %v885 = vld [vmem:[%s273 + $0x90] sm:$0xff]
        %v886 = vld [vmem:[%s273 + $0x98] sm:$0xff]
        %v887 = vld [vmem:[%s273 + $0xa0] sm:$0xff]
        %v888 = vld [vmem:[%s273 + $0xa8] sm:$0xff]
        %v889 = vld [vmem:[%s273 + $0xb0] sm:$0xff]
        %v890 = vld [vmem:[%s273 + $0xb8] sm:$0xff]
        %v891 = vld [vmem:[%s273 + $0xc0] sm:$0xff]
        %v892 = vld [vmem:[%s273 + $0xc8] sm:$0xff]
        %v893 = vld [vmem:[%s273 + $0xd0] sm:$0xff]
        %v894 = vld [vmem:[%s273 + $0xd8] sm:$0xff]
        %v895 = vld [vmem:[%s273 + $0xe0] sm:$0xff]
        %v896 = vld [vmem:[%s273 + $0xe8] sm:$0xff]
        %v897 = vld [vmem:[%s273 + $0xf0] sm:$0xff]
        %v898 = vld [vmem:[%s273 + $0xf8] sm:$0xff]
        %v931 = vunpack.c.l.b16 %v867
        %v932 = vunpack.c.h.b16 %v867
        %v933 = vunpack.c.l.b16 %v868
        %v934 = vunpack.c.h.b16 %v868
        %v935 = vunpack.c.l.b16 %v869
        %v936 = vunpack.c.h.b16 %v869
        %v937 = vunpack.c.l.b16 %v870
        %v938 = vunpack.c.h.b16 %v870
        %v939 = vunpack.c.l.b16 %v871
        %v940 = vunpack.c.h.b16 %v871
        %v941 = vunpack.c.l.b16 %v872
        %v942 = vunpack.c.h.b16 %v872
        %v943 = vunpack.c.l.b16 %v873
        %v944 = vunpack.c.h.b16 %v873
        %v945 = vunpack.c.l.b16 %v874
        %v946 = vunpack.c.h.b16 %v874
        %v947 = vunpack.c.l.b16 %v875
        %v948 = vunpack.c.h.b16 %v875
        %v949 = vunpack.c.l.b16 %v876
        %v950 = vunpack.c.h.b16 %v876
        %v951 = vunpack.c.l.b16 %v877
        %v952 = vunpack.c.h.b16 %v877
        %v953 = vunpack.c.l.b16 %v878
        %v954 = vunpack.c.h.b16 %v878
        %v955 = vunpack.c.l.b16 %v879
        %v956 = vunpack.c.h.b16 %v879
        %v957 = vunpack.c.l.b16 %v880
        %v958 = vunpack.c.h.b16 %v880
        %v959 = vunpack.c.l.b16 %v881
        %v960 = vunpack.c.h.b16 %v881
        %v961 = vunpack.c.l.b16 %v882
        %v962 = vunpack.c.h.b16 %v882
        %v963 = vunpack.c.l.b16 %v883
        %v964 = vunpack.c.h.b16 %v883
        %v965 = vunpack.c.l.b16 %v884
        %v966 = vunpack.c.h.b16 %v884
        %v967 = vunpack.c.l.b16 %v885
        %v968 = vunpack.c.h.b16 %v885
        %v969 = vunpack.c.l.b16 %v886
        %v970 = vunpack.c.h.b16 %v886
        %v971 = vunpack.c.l.b16 %v887
        %v972 = vunpack.c.h.b16 %v887
        %v973 = vunpack.c.l.b16 %v888
        %v974 = vunpack.c.h.b16 %v888
        %v975 = vunpack.c.l.b16 %v889
        %v976 = vunpack.c.h.b16 %v889
        %v977 = vunpack.c.l.b16 %v890
        %v978 = vunpack.c.h.b16 %v890
        %v979 = vunpack.c.l.b16 %v891
        %v980 = vunpack.c.h.b16 %v891
        %v981 = vunpack.c.l.b16 %v892
        %v982 = vunpack.c.h.b16 %v892
        %v983 = vunpack.c.l.b16 %v893
        %v984 = vunpack.c.h.b16 %v893
        %v985 = vunpack.c.l.b16 %v894
        %v986 = vunpack.c.h.b16 %v894
        %v987 = vunpack.c.l.b16 %v895
        %v988 = vunpack.c.h.b16 %v895
        %v989 = vunpack.c.l.b16 %v896
        %v990 = vunpack.c.h.b16 %v896
        %v991 = vunpack.c.l.b16 %v897
        %v992 = vunpack.c.h.b16 %v897
        %v993 = vunpack.c.l.b16 %v898
        %v994 = vunpack.c.h.b16 %v898
        %v995 = vpack.c.b16 %v933, %v931
        %v996 = vpack.c.b16 %v934, %v932
        %v997 = vpack.c.b16 %v937, %v935
        %v998 = vpack.c.b16 %v938, %v936
        %v999 = vpack.c.b16 %v941, %v939
        %v1000 = vpack.c.b16 %v942, %v940
        %v1001 = vpack.c.b16 %v945, %v943
        %v1002 = vpack.c.b16 %v946, %v944
        %v1003 = vpack.c.b16 %v949, %v947
        %v1004 = vpack.c.b16 %v950, %v948
        %v1005 = vpack.c.b16 %v953, %v951
        %v1006 = vpack.c.b16 %v954, %v952
        %v1007 = vpack.c.b16 %v957, %v955
        %v1008 = vpack.c.b16 %v958, %v956
        %v1009 = vpack.c.b16 %v961, %v959
        %v1010 = vpack.c.b16 %v962, %v960
        %v1011 = vpack.c.b16 %v965, %v963
        %v1012 = vpack.c.b16 %v966, %v964
        %v1013 = vpack.c.b16 %v969, %v967
        %v1014 = vpack.c.b16 %v970, %v968
        %v1015 = vpack.c.b16 %v973, %v971
        %v1016 = vpack.c.b16 %v974, %v972
        %v1017 = vpack.c.b16 %v977, %v975
        %v1018 = vpack.c.b16 %v978, %v976
        %v1019 = vpack.c.b16 %v981, %v979
        %v1020 = vpack.c.b16 %v982, %v980
        %v1021 = vpack.c.b16 %v985, %v983
        %v1022 = vpack.c.b16 %v986, %v984
        %v1023 = vpack.c.b16 %v989, %v987
        %v1024 = vpack.c.b16 %v990, %v988
        %v1025 = vpack.c.b16 %v993, %v991
        %v1026 = vpack.c.b16 %v994, %v992
        %1059 = vmatpush.bf16.msra.mxu0 %v1009
        %1060 = vmatpush.bf16.msra.mxu0 %v1007
        %1061 = vmatpush.bf16.msra.mxu0 %v1005
        %1062 = vmatpush.bf16.msra.mxu0 %v1003
        %1063 = vmatpush.bf16.msra.mxu0 %v1001
        %1064 = vmatpush.bf16.msra.mxu0 %v999
        %1065 = vmatpush.bf16.msra.mxu0 %v997
        %1066 = vmatpush.bf16.msra.mxu0 %v995
        %1067 = vmatmul.bf16.gmra.mxu0 %v865
        %v1068 = vpop.f32.mrf.mxu0
        %v1069 = vadd.f32 0.0, %v1068
        %v1070 = vpop.f32.mrf.mxu0
        %1071 = vdwg.mxu0
        %1072 = vmatpush.bf16.msra.mxu0 %v1025
        %1073 = vmatpush.bf16.msra.mxu0 %v1023
        %1074 = vmatpush.bf16.msra.mxu0 %v1021
        %1075 = vmatpush.bf16.msra.mxu0 %v1019
        %1076 = vmatpush.bf16.msra.mxu0 %v1017
        %1077 = vmatpush.bf16.msra.mxu0 %v1015
        %1078 = vmatpush.bf16.msra.mxu0 %v1013
        %1079 = vmatpush.bf16.msra.mxu0 %v1011
        %1080 = vmatmul.bf16.gmra.mxu0 %v866
        %v1081 = vpop.f32.mrf.mxu0
        %v1082 = vadd.f32 %v1069, %v1081
        %v1083 = vpop.f32.mrf.mxu0
        %1084 = vdwg.mxu0
        %1085 = vmatpush.bf16.msra.mxu0 %v1010
        %1086 = vmatpush.bf16.msra.mxu0 %v1008
        %1087 = vmatpush.bf16.msra.mxu0 %v1006
        %1088 = vmatpush.bf16.msra.mxu0 %v1004
        %1089 = vmatpush.bf16.msra.mxu0 %v1002
        %1090 = vmatpush.bf16.msra.mxu0 %v1000
        %1091 = vmatpush.bf16.msra.mxu0 %v998
        %1092 = vmatpush.bf16.msra.mxu0 %v996
        %1093 = vmatmul.bf16.gmra.mxu0 %v865
        %v1094 = vpop.f32.mrf.mxu0
        %v1095 = vadd.f32 0.0, %v1094
        %v1096 = vpop.f32.mrf.mxu0
        %1097 = vdwg.mxu0
        %1098 = vmatpush.bf16.msra.mxu0 %v1026
        %1099 = vmatpush.bf16.msra.mxu0 %v1024
        %1100 = vmatpush.bf16.msra.mxu0 %v1022
        %1101 = vmatpush.bf16.msra.mxu0 %v1020
        %1102 = vmatpush.bf16.msra.mxu0 %v1018
        %1103 = vmatpush.bf16.msra.mxu0 %v1016
        %1104 = vmatpush.bf16.msra.mxu0 %v1014
        %1105 = vmatpush.bf16.msra.mxu0 %v1012
        %1106 = vmatmul.bf16.gmra.mxu0 %v866
        %v1107 = vpop.f32.mrf.mxu0
        %v1108 = vadd.f32 %v1095, %v1107
        %v1109 = vpop.f32.mrf.mxu0
        %1110 = vdwg.mxu0
        %1111 = vst [vmem:[%s316] sm:$0xff] %v1082
        %1112 = vst [vmem:[%s316 + $0x8] sm:$0xff] %v1108
        %p1113 = scmp.lt.s32.totalorder %s22, 1
        %s1114 = scalar_select %p1113, %s22, 1
        %s1115 = smul.addr %s1114, 2
        %s1116 = smul.addr %s1115, 8
        %s1117 = scalar_lea.vmem %s4, %s1116
        // Predicated region
        $region53: #{bottleneck_forward.1} parent=35 // pred_check
          %p1118 = pneg %p139
        $region54: #{bottleneck_forward.1} parent=35 // pred_check_branch
          %1120 = sbr.rel (%p1118) target = $region56
        $region55: #{bottleneck_forward.1} parent=35 // pred_region
          _
        $region56: #{bottleneck_forward.1} parent=35 // pred_fallthru
          _
      $region36: #{bottleneck_forward.1} parent=5 // pred_fallthru
        _
      %p1121 = scmp.le.s32.totalorder 2, %s17
      // Predicated region
      $region57: #{bottleneck_forward.1} parent=5 // pred_check
        %p1122 = pneg %p1121
      $region58: #{bottleneck_forward.1} parent=5 // pred_check_branch
        %1124 = sbr.rel (%p1122) target = $region60
      $region59: #{bottleneck_forward.1} parent=5 // pred_region
        %s1125 = ssub.s32 %s17, 2
        // Predicated region
        $region61: #{bottleneck_forward.1} parent=59 // pred_check
          %p1126 = pneg %p145
        $region62: #{bottleneck_forward.1} parent=59 // pred_check_branch
          %1128 = sbr.rel (%p1126) target = $region64
        $region63: #{bottleneck_forward.1} parent=59 // pred_region
          %p1129 = scmp.lt.s32.totalorder %s23, 1
          %s1130 = scalar_select %p1129, %s23, 1
          %s1131 = smul.addr %s1130, 2
          %s1132 = smul.addr %s1131, 8
          %s1133 = scalar_lea.vmem %s4, %s1132
        $region64: #{bottleneck_forward.1} parent=59 // pred_fallthru
          _
      $region60: #{bottleneck_forward.1} parent=5 // pred_fallthru
        _
    $region6: #{bottleneck_forward.1} parent=1 // loop_footer
      %s21 = sadd.s32 1, %s17
    $region7: #{bottleneck_forward.1} parent=1 // loop_footer_branch
      %16 = sbr.rel target = $region3
    $region8: #{bottleneck_forward.1} parent=1 // loop_exit
      _
    %1134 = vsyncpa [#allocation3], 1
    %s1135 = scalar_lea.sflag [#allocation3], 1
    %1136 = vsyncpa %s1135, 1
    %1137 = vsyncpa [#allocation5], 1
    %s1138 = scalar_lea.sflag [#allocation5], 1
    %1139 = vsyncpa %s1138, 1
    %1140 = vsyncpa [#allocation8], 1
    %s1141 = scalar_lea.sflag [#allocation8], 1
    %1142 = vsyncpa %s1141, 1

</llo_original>
